<compile_context>
chip_gen: v7x
topology: tpu7x:2x2x1
jax: 0.10.0
libtpu: 0.0.40
codegen_flags: <defaults>
</compile_context>

<pallas_src>
import jax
import jax.numpy as jnp
from jax.experimental import pallas as pl
from jax.experimental.pallas import tpu as pltpu

BN_EPS = 1e-5


def _round_up(n: int, m: int) -> int:
    return ((n + m - 1) // m) * m


def _mlp_kernel(x_ref,
                w1_ref, b1_ref,
                w2_ref, b2_ref,
                w3_ref, b3_ref,
                w4_ref, b4_ref,
                o_ref):
    """Forward pass for one batch tile, batch on the lane axis.

    x_ref : (3,  TB) float32   input tile (batch = lanes)
    wK    : (out, in) float32  PyTorch layout; BN already folded into w1..w3/b1..b3
    bK    : (out, 1)  float32  column bias, broadcast across lanes
    o_ref : (4,  TB) float32
    """
    x = x_ref[...]

    # fc1 (+bn1 folded) -> relu
    h = jnp.maximum(
        jnp.dot(w1_ref[...], x, preferred_element_type=jnp.float32) + b1_ref[...], 0.0)
    # fc2 (+bn2 folded) -> relu
    h = jnp.maximum(
        jnp.dot(w2_ref[...], h, preferred_element_type=jnp.float32) + b2_ref[...], 0.0)
    # fc3 (+bn3 folded) -> relu
    h = jnp.maximum(
        jnp.dot(w3_ref[...], h, preferred_element_type=jnp.float32) + b3_ref[...], 0.0)
    # dropout(eval) = identity ; final Linear
    o_ref[...] = (
        jnp.dot(w4_ref[...], h, preferred_element_type=jnp.float32) + b4_ref[...])


def study_duration_predictor(x, params, *, tb_max=1024):
    """x: (B, 3) float32 -> (B, 4) float32 (eval-mode forward)."""
    B, D = x.shape

    # Batch tile: multiple of 128 (lane width), capped at tb_max.
    TB = min(tb_max, _round_up(B, 128))
    B_pad = _round_up(B, TB)

    # Fold BatchNorm (running stats) into the preceding Linear.
    def fold(w, b, bn):
        gamma, beta, mean, var = bn
        scale = gamma / jnp.sqrt(var + BN_EPS)          # (out,)
        shift = beta - mean * scale                     # (out,)
        return w * scale[:, None], (b * scale + shift)[:, None]

    w1, b1 = fold(params["w1"], params["b1"], params["bn1"])
    w2, b2 = fold(params["w2"], params["b2"], params["bn2"])
    w3, b3 = fold(params["w3"], params["b3"], params["bn3"])
    w4, b4 = params["w4"], params["b4"][:, None]

    # Batch on lanes: (3, B_pad), zero-padded tail columns (discarded at the end;
    # eval-mode BN has no cross-batch coupling so padding is harmless).
    xT = jnp.pad(jnp.transpose(x), ((0, 0), (0, B_pad - B)))

    def resident(arr):
        # Weights/biases: same block every grid step -> stay VMEM-resident.
        return pl.BlockSpec(arr.shape, lambda i: (0, 0))

    out_t = pl.pallas_call(
        _mlp_kernel,
        out_shape=jax.ShapeDtypeStruct((4, B_pad), jnp.float32),
        grid=(B_pad // TB,),
        in_specs=[
            pl.BlockSpec((D, TB), lambda i: (0, i)),   # x tile, pipelined over batch
            resident(w1), resident(b1),
            resident(w2), resident(b2),
            resident(w3), resident(b3),
            resident(w4), resident(b4),
        ],
        out_specs=pl.BlockSpec((4, TB), lambda i: (0, i)),
        compiler_params=pltpu.CompilerParams(
            dimension_semantics=("parallel",),          # shard batch tiles across TCs
            vmem_limit_bytes=16 * 1024 * 1024,          # weights + 2x tiles are tiny
        ),
    )(xT, w1, b1, w2, b2, w3, b3, w4, b4)

    return jnp.transpose(out_t[:, :B])


def init_params(key, input_dim=3):
    """Deterministic synthetic parameters matching the module's shapes.

    Weights are kept in PyTorch layout (out, in)."""
    dims = [(input_dim, 64), (64, 32), (32, 16), (16, 4)]
    params = {}
    keys = jax.random.split(key, 16)
    ki = 0
    for li, (fan_in, fan_out) in enumerate(dims, start=1):
        bound = 1.0 / jnp.sqrt(jnp.float32(fan_in))
        w = jax.random.uniform(keys[ki], (fan_out, fan_in), jnp.float32, -bound, bound); ki += 1
        b = jax.random.uniform(keys[ki], (fan_out,), jnp.float32, -bound, bound); ki += 1
        params[f"w{li}"] = w
        params[f"b{li}"] = b
    # BatchNorm1d params (gamma, beta, running_mean, running_var) for 64/32/16.
    for li, h in zip((1, 2, 3), (64, 32, 16)):
        gamma = jax.random.uniform(keys[ki], (h,), jnp.float32, 0.5, 1.5); ki += 1
        beta = jax.random.uniform(keys[ki], (h,), jnp.float32, -0.5, 0.5); ki += 1
        kk = jax.random.split(keys[ki], 2)
        mean = jax.random.normal(kk[0], (h,), jnp.float32) * 0.1
        var = jax.random.uniform(kk[1], (h,), jnp.float32, 0.5, 1.5)
        params[f"bn{li}"] = (gamma, beta, mean, var)
    return params


def reference_forward(x, params):
    """Pure-JAX reference (same eval-mode semantics) for a sanity check."""
    def bn(h, gamma, beta, mean, var):
        return (h - mean) / jnp.sqrt(var + BN_EPS) * gamma + beta

    h = jnp.maximum(bn(x @ params["w1"].T + params["b1"], *params["bn1"]), 0.0)
    h = jnp.maximum(bn(h @ params["w2"].T + params["b2"], *params["bn2"]), 0.0)
    h = jnp.maximum(bn(h @ params["w3"].T + params["b3"], *params["bn3"]), 0.0)
    return h @ params["w4"].T + params["b4"]


if __name__ == "__main__":
    key = jax.random.PRNGKey(0)
    k_param, k_x = jax.random.split(key)

    B, INPUT_DIM = 8, 3
    params = init_params(k_param, INPUT_DIM)
    x = jax.random.normal(k_x, (B, INPUT_DIM), jnp.float32)

    out = study_duration_predictor(x, params)
    out = jax.block_until_ready(out)

    ref = reference_forward(x, params)
    assert out.shape == (B, 4)
    assert jnp.allclose(out, ref, atol=1e-4, rtol=1e-4), "mismatch vs reference"

    # Also exercise a batch that spans multiple grid tiles / non-multiple of TB.
    xb = jax.random.normal(jax.random.PRNGKey(7), (300, INPUT_DIM), jnp.float32)
    outb = jax.block_until_ready(study_duration_predictor(xb, params, tb_max=128))
    assert jnp.allclose(outb, reference_forward(xb, params), atol=1e-4, rtol=1e-4)

    print("KERNEL_OK")
</pallas_src>

<mosaic_0001>
module attributes {stable_mosaic.version = 11 : i64} {
  func.func @_mlp_kernel(%arg0: i32, %arg1: memref<3x128xf32, #tpu.memory_space<vmem>>, %arg2: memref<64x3xf32, #tpu.memory_space<vmem>>, %arg3: memref<64x1xf32, #tpu.memory_space<vmem>>, %arg4: memref<32x64xf32, #tpu.memory_space<vmem>>, %arg5: memref<32x1xf32, #tpu.memory_space<vmem>>, %arg6: memref<16x32xf32, #tpu.memory_space<vmem>>, %arg7: memref<16x1xf32, #tpu.memory_space<vmem>>, %arg8: memref<4x16xf32, #tpu.memory_space<vmem>>, %arg9: memref<4x1xf32, #tpu.memory_space<vmem>>, %arg10: memref<4x128xf32, #tpu.memory_space<vmem>>) attributes {dimension_semantics = [#tpu.dimension_semantics<parallel>], iteration_bounds = array<i64: 1>, scalar_prefetch = 0 : i64, scratch_operands = 0 : i64, tpu.core_type = #tpu.core_type<tc>, window_params = [{transform_indices = @transform_0, window_bounds = array<i64: 3, 128>}, {pipeline_mode = #tpu.pipeline_mode<synchronous>, transform_indices = @transform_1, window_bounds = array<i64: 64, 3>}, {pipeline_mode = #tpu.pipeline_mode<synchronous>, transform_indices = @transform_2, window_bounds = array<i64: 64, 1>}, {pipeline_mode = #tpu.pipeline_mode<synchronous>, transform_indices = @transform_3, window_bounds = array<i64: 32, 64>}, {pipeline_mode = #tpu.pipeline_mode<synchronous>, transform_indices = @transform_4, window_bounds = array<i64: 32, 1>}, {pipeline_mode = #tpu.pipeline_mode<synchronous>, transform_indices = @transform_5, window_bounds = array<i64: 16, 32>}, {pipeline_mode = #tpu.pipeline_mode<synchronous>, transform_indices = @transform_6, window_bounds = array<i64: 16, 1>}, {pipeline_mode = #tpu.pipeline_mode<synchronous>, transform_indices = @transform_7, window_bounds = array<i64: 4, 16>}, {pipeline_mode = #tpu.pipeline_mode<synchronous>, transform_indices = @transform_8, window_bounds = array<i64: 4, 1>}, {transform_indices = @transform_9, window_bounds = array<i64: 4, 128>}]} {
    %c0 = arith.constant 0 : index
    %c0_0 = arith.constant 0 : index
    %0 = vector.load %arg1[%c0, %c0_0] : memref<3x128xf32, #tpu.memory_space<vmem>>, vector<3x128xf32>
    %c0_1 = arith.constant 0 : index
    %c0_2 = arith.constant 0 : index
    %1 = vector.load %arg2[%c0_1, %c0_2] : memref<64x3xf32, #tpu.memory_space<vmem>>, vector<64x3xf32>
    %cst = arith.constant dense<0.000000e+00> : vector<64x128xf32>
    %2 = tpu.matmul %1, %0, %cst {dimension_numbers = #tpu.dot_dimension_numbers<[1], [0], [0], [1], [0, 0, 1, 1], [], []>} : vector<64x3xf32>, vector<3x128xf32>, vector<64x128xf32> -> vector<64x128xf32>
    %c0_3 = arith.constant 0 : index
    %c0_4 = arith.constant 0 : index
    %3 = vector.load %arg3[%c0_3, %c0_4] : memref<64x1xf32, #tpu.memory_space<vmem>>, vector<64x1xf32>
    %4 = vector.broadcast %3 : vector<64x1xf32> to vector<64x128xf32>
    %5 = arith.addf %2, %4 : vector<64x128xf32>
    %cst_5 = arith.constant 0.000000e+00 : f32
    %6 = vector.broadcast %cst_5 : f32 to vector<64x128xf32>
    %7 = arith.maximumf %5, %6 : vector<64x128xf32>
    %c0_6 = arith.constant 0 : index
    %c0_7 = arith.constant 0 : index
    %8 = vector.load %arg4[%c0_6, %c0_7] : memref<32x64xf32, #tpu.memory_space<vmem>>, vector<32x64xf32>
    %cst_8 = arith.constant dense<0.000000e+00> : vector<32x128xf32>
    %9 = tpu.matmul %8, %7, %cst_8 {dimension_numbers = #tpu.dot_dimension_numbers<[1], [0], [0], [1], [0, 0, 1, 1], [], []>} : vector<32x64xf32>, vector<64x128xf32>, vector<32x128xf32> -> vector<32x128xf32>
    %c0_9 = arith.constant 0 : index
    %c0_10 = arith.constant 0 : index
    %10 = vector.load %arg5[%c0_9, %c0_10] : memref<32x1xf32, #tpu.memory_space<vmem>>, vector<32x1xf32>
    %11 = vector.broadcast %10 : vector<32x1xf32> to vector<32x128xf32>
    %12 = arith.addf %9, %11 : vector<32x128xf32>
    %cst_11 = arith.constant 0.000000e+00 : f32
    %13 = vector.broadcast %cst_11 : f32 to vector<32x128xf32>
    %14 = arith.maximumf %12, %13 : vector<32x128xf32>
    %c0_12 = arith.constant 0 : index
    %c0_13 = arith.constant 0 : index
    %15 = vector.load %arg6[%c0_12, %c0_13] : memref<16x32xf32, #tpu.memory_space<vmem>>, vector<16x32xf32>
    %cst_14 = arith.constant dense<0.000000e+00> : vector<16x128xf32>
    %16 = tpu.matmul %15, %14, %cst_14 {dimension_numbers = #tpu.dot_dimension_numbers<[1], [0], [0], [1], [0, 0, 1, 1], [], []>} : vector<16x32xf32>, vector<32x128xf32>, vector<16x128xf32> -> vector<16x128xf32>
    %c0_15 = arith.constant 0 : index
    %c0_16 = arith.constant 0 : index
    %17 = vector.load %arg7[%c0_15, %c0_16] : memref<16x1xf32, #tpu.memory_space<vmem>>, vector<16x1xf32>
    %18 = vector.broadcast %17 : vector<16x1xf32> to vector<16x128xf32>
    %19 = arith.addf %16, %18 : vector<16x128xf32>
    %cst_17 = arith.constant 0.000000e+00 : f32
    %20 = vector.broadcast %cst_17 : f32 to vector<16x128xf32>
    %21 = arith.maximumf %19, %20 : vector<16x128xf32>
    %c0_18 = arith.constant 0 : index
    %c0_19 = arith.constant 0 : index
    %22 = vector.load %arg8[%c0_18, %c0_19] : memref<4x16xf32, #tpu.memory_space<vmem>>, vector<4x16xf32>
    %cst_20 = arith.constant dense<0.000000e+00> : vector<4x128xf32>
    %23 = tpu.matmul %22, %21, %cst_20 {dimension_numbers = #tpu.dot_dimension_numbers<[1], [0], [0], [1], [0, 0, 1, 1], [], []>} : vector<4x16xf32>, vector<16x128xf32>, vector<4x128xf32> -> vector<4x128xf32>
    %c0_21 = arith.constant 0 : index
    %c0_22 = arith.constant 0 : index
    %24 = vector.load %arg9[%c0_21, %c0_22] : memref<4x1xf32, #tpu.memory_space<vmem>>, vector<4x1xf32>
    %25 = vector.broadcast %24 : vector<4x1xf32> to vector<4x128xf32>
    %26 = arith.addf %23, %25 : vector<4x128xf32>
    %c0_23 = arith.constant 0 : index
    %c0_24 = arith.constant 0 : index
    %27 = vector.load %arg10[%c0_23, %c0_24] : memref<4x128xf32, #tpu.memory_space<vmem>>, vector<4x128xf32>
    tpu.vector_store %arg10[%c0_23, %c0_24], %26 {strides = array<i32>} : memref<4x128xf32, #tpu.memory_space<vmem>>, vector<4x128xf32>,
    return
  }
  func.func @transform_0(%arg0: i32) -> (i32, i32) {
    %c0_i32 = arith.constant 0 : i32
    %c0_i32_0 = arith.constant 0 : i32
    return %c0_i32, %arg0 : i32, i32
  }
  func.func @transform_1(%arg0: i32) -> (i32, i32) {
    %c0_i32 = arith.constant 0 : i32
    %c0_i32_0 = arith.constant 0 : i32
    %c0_i32_1 = arith.constant 0 : i32
    return %c0_i32, %c0_i32_0 : i32, i32
  }
  func.func @transform_2(%arg0: i32) -> (i32, i32) {
    %c0_i32 = arith.constant 0 : i32
    %c0_i32_0 = arith.constant 0 : i32
    %c0_i32_1 = arith.constant 0 : i32
    return %c0_i32, %c0_i32_0 : i32, i32
  }
  func.func @transform_3(%arg0: i32) -> (i32, i32) {
    %c0_i32 = arith.constant 0 : i32
    %c0_i32_0 = arith.constant 0 : i32
    %c0_i32_1 = arith.constant 0 : i32
    return %c0_i32, %c0_i32_0 : i32, i32
  }
  func.func @transform_4(%arg0: i32) -> (i32, i32) {
    %c0_i32 = arith.constant 0 : i32
    %c0_i32_0 = arith.constant 0 : i32
    %c0_i32_1 = arith.constant 0 : i32
    return %c0_i32, %c0_i32_0 : i32, i32
  }
  func.func @transform_5(%arg0: i32) -> (i32, i32) {
    %c0_i32 = arith.constant 0 : i32
    %c0_i32_0 = arith.constant 0 : i32
    %c0_i32_1 = arith.constant 0 : i32
    return %c0_i32, %c0_i32_0 : i32, i32
  }
  func.func @transform_6(%arg0: i32) -> (i32, i32) {
    %c0_i32 = arith.constant 0 : i32
    %c0_i32_0 = arith.constant 0 : i32
    %c0_i32_1 = arith.constant 0 : i32
    return %c0_i32, %c0_i32_0 : i32, i32
  }
  func.func @transform_7(%arg0: i32) -> (i32, i32) {
    %c0_i32 = arith.constant 0 : i32
    %c0_i32_0 = arith.constant 0 : i32
    %c0_i32_1 = arith.constant 0 : i32
    return %c0_i32, %c0_i32_0 : i32, i32
  }
  func.func @transform_8(%arg0: i32) -> (i32, i32) {
    %c0_i32 = arith.constant 0 : i32
    %c0_i32_0 = arith.constant 0 : i32
    %c0_i32_1 = arith.constant 0 : i32
    return %c0_i32, %c0_i32_0 : i32, i32
  }
  func.func @transform_9(%arg0: i32) -> (i32, i32) {
    %c0_i32 = arith.constant 0 : i32
    %c0_i32_0 = arith.constant 0 : i32
    return %c0_i32, %arg0 : i32, i32
  }
}

</mosaic_0001>

<llo_original>
// kernel: tpu_custom_call.1
$region0: #{tpu_custom_call.1}
  #allocation0 [shape = 'u32[]', space=smem, size = 0x4, offset = 0x4, fixed_abs, tag = 'smem constant byte address 0x4 - core index']
  #allocation1 [shape = 'u32[144,128]{1,0:T(1,128)}', space=vmem, size = 0x12000, scoped, tag = 'internal scratch']
  %s0 = inlined_call_operand.vmem [shape: f32[3,128], index: 0, kind: input, shape index: {}]
  %s1 = inlined_call_operand.vmem [shape: f32[64,3], index: 1, kind: input, shape index: {}]
  %s2 = inlined_call_operand.vmem [shape: f32[64,1], index: 2, kind: input, shape index: {}]
  %s3 = inlined_call_operand.vmem [shape: f32[32,64], index: 3, kind: input, shape index: {}]
  %s4 = inlined_call_operand.vmem [shape: f32[32,1], index: 4, kind: input, shape index: {}]
  %s5 = inlined_call_operand.vmem [shape: f32[16,32], index: 5, kind: input, shape index: {}]
  %s6 = inlined_call_operand.vmem [shape: f32[16,1], index: 6, kind: input, shape index: {}]
  %s7 = inlined_call_operand.vmem [shape: f32[4,16], index: 7, kind: input, shape index: {}]
  %s8 = inlined_call_operand.vmem [shape: f32[4,1], index: 8, kind: input, shape index: {}]
  %s9 = inlined_call_operand.hbm [shape: f32[4,128], index: 9, kind: output, shape index: {}]
  %s10 = sld [smem:[#allocation0]]
  $region46: #{tpu_custom_call.1} parent=0
    _
  %s12 = ssub.s32 1, %s10
  %s13 = scalar_select 0, %s12, %s10
  $region1: #{tpu_custom_call.1} parent=0
    #allocation2 [shape = 'u8[2048]{0}', space=vmem, size = 0x800, scoped, tag = 'output window, operand 0, single buffered']
    #allocation3 [shape = 's32[1]{0}', space=sflag, size = 0x4, scoped, tag = 'scoped memory for tpu_custom_call.1']
    %14 = vsyncpa [#allocation3], 0
    // Predicated region
    $region2: #{tpu_custom_call.1} parent=1 // pred_check
      _
    $region3: #{tpu_custom_call.1} parent=1 // pred_check_branch
      %16 = sbr.rel (0) target = $region5
    $region4: #{tpu_custom_call.1} parent=1 // pred_region
      _
    $region5: #{tpu_custom_call.1} parent=1 // pred_fallthru
      _
    // Predicated region
    $region6: #{tpu_custom_call.1} parent=1 // pred_check
      _
    $region7: #{tpu_custom_call.1} parent=1 // pred_check_branch
      %18 = sbr.rel (0) target = $region9
    $region8: #{tpu_custom_call.1} parent=1 // pred_region
      _
    $region9: #{tpu_custom_call.1} parent=1 // pred_fallthru
      _
    // Predicated region
    $region10: #{tpu_custom_call.1} parent=1 // pred_check
      _
    $region11: #{tpu_custom_call.1} parent=1 // pred_check_branch
      %20 = sbr.rel (0) target = $region13
    $region12: #{tpu_custom_call.1} parent=1 // pred_region
      _
    $region13: #{tpu_custom_call.1} parent=1 // pred_fallthru
      _
    // Predicated region
    $region14: #{tpu_custom_call.1} parent=1 // pred_check
      _
    $region15: #{tpu_custom_call.1} parent=1 // pred_check_branch
      %22 = sbr.rel (0) target = $region17
    $region16: #{tpu_custom_call.1} parent=1 // pred_region
      _
    $region17: #{tpu_custom_call.1} parent=1 // pred_fallthru
      _
    // Predicated region
    $region18: #{tpu_custom_call.1} parent=1 // pred_check
      _
    $region19: #{tpu_custom_call.1} parent=1 // pred_check_branch
      %24 = sbr.rel (0) target = $region21
    $region20: #{tpu_custom_call.1} parent=1 // pred_region
      _
    $region21: #{tpu_custom_call.1} parent=1 // pred_fallthru
      _
    // Predicated region
    $region22: #{tpu_custom_call.1} parent=1 // pred_check
      _
    $region23: #{tpu_custom_call.1} parent=1 // pred_check_branch
      %26 = sbr.rel (0) target = $region25
    $region24: #{tpu_custom_call.1} parent=1 // pred_region
      _
    $region25: #{tpu_custom_call.1} parent=1 // pred_fallthru
      _
    // Predicated region
    $region26: #{tpu_custom_call.1} parent=1 // pred_check
      _
    $region27: #{tpu_custom_call.1} parent=1 // pred_check_branch
      %28 = sbr.rel (0) target = $region29
    $region28: #{tpu_custom_call.1} parent=1 // pred_region
      _
    $region29: #{tpu_custom_call.1} parent=1 // pred_fallthru
      _
    // Predicated region
    $region30: #{tpu_custom_call.1} parent=1 // pred_check
      _
    $region31: #{tpu_custom_call.1} parent=1 // pred_check_branch
      %30 = sbr.rel (0) target = $region33
    $region32: #{tpu_custom_call.1} parent=1 // pred_region
      _
    $region33: #{tpu_custom_call.1} parent=1 // pred_fallthru
      _
    // Predicated region
    $region34: #{tpu_custom_call.1} parent=1 // pred_check
      _
    $region35: #{tpu_custom_call.1} parent=1 // pred_check_branch
      %32 = sbr.rel (0) target = $region37
    $region36: #{tpu_custom_call.1} parent=1 // pred_region
      _
    $region37: #{tpu_custom_call.1} parent=1 // pred_fallthru
      _
    %v33 = vld [vmem:[%s0] sm:$0x7]
    %v34 = vld [vmem:[%s1] sm:$0xff]
    %v35 = vld [vmem:[%s1 + $0x8] sm:$0xff]
    %v36 = vld [vmem:[%s1 + $0x10] sm:$0xff]
    %v37 = vld [vmem:[%s1 + $0x18] sm:$0xff]
    %v38 = vld [vmem:[%s1 + $0x20] sm:$0xff]
    %v39 = vld [vmem:[%s1 + $0x28] sm:$0xff]
    %v40 = vld [vmem:[%s1 + $0x30] sm:$0xff]
    %v41 = vld [vmem:[%s1 + $0x38] sm:$0xff]
    %v42 = vld [vmem:[%s2] sm:$0xff]
    %v43 = vld [vmem:[%s2 + $0x8] sm:$0xff]
    %v44 = vld [vmem:[%s2 + $0x10] sm:$0xff]
    %v45 = vld [vmem:[%s2 + $0x18] sm:$0xff]
    %v46 = vld [vmem:[%s2 + $0x20] sm:$0xff]
    %v47 = vld [vmem:[%s2 + $0x28] sm:$0xff]
    %v48 = vld [vmem:[%s2 + $0x30] sm:$0xff]
    %v49 = vld [vmem:[%s2 + $0x38] sm:$0xff]
    %51 = vset.pattern.permute.xlu0 0
    %52 = vperm.xlu0 %51, %v42
    %v53 = vpop.permute.xlu0 %52
    %56 = vset.pattern.permute.xlu0 0
    %57 = vperm.xlu0 %56, %v43
    %v58 = vpop.permute.xlu0 %57
    %61 = vset.pattern.permute.xlu0 0
    %62 = vperm.xlu0 %61, %v44
    %v63 = vpop.permute.xlu0 %62
    %66 = vset.pattern.permute.xlu0 0
    %67 = vperm.xlu0 %66, %v45
    %v68 = vpop.permute.xlu0 %67
    %71 = vset.pattern.permute.xlu0 0
    %72 = vperm.xlu0 %71, %v46
    %v73 = vpop.permute.xlu0 %72
    %76 = vset.pattern.permute.xlu0 0
    %77 = vperm.xlu0 %76, %v47
    %v78 = vpop.permute.xlu0 %77
    %81 = vset.pattern.permute.xlu0 0
    %82 = vperm.xlu0 %81, %v48
    %v83 = vpop.permute.xlu0 %82
    %86 = vset.pattern.permute.xlu0 0
    %87 = vperm.xlu0 %86, %v49
    %v88 = vpop.permute.xlu0 %87
    %vm90 = vcmask 23552
    %v92 = vsel %vm90, %v34, 0
    %v95 = vsel %vm90, %v35, 0
    %v98 = vsel %vm90, %v36, 0
    %v101 = vsel %vm90, %v37, 0
    %v104 = vsel %vm90, %v38, 0
    %v107 = vsel %vm90, %v39, 0
    %v110 = vsel %vm90, %v40, 0
    %v113 = vsel %vm90, %v41, 0
    %vm115 = vcmask 1042432
    %v117 = vsel %vm115, %v33, 0
    %119 = vmatprep.subr.mxu0 0.0
    %120 = vmatpush1.msra.mxu0 %v117
    %121 = vmatprep.subr.mxu0 0.0
    %122 = vmatpush1.msra.mxu0 0.0
    %123 = vmatprep.subr.mxu0 0.0
    %124 = vmatpush1.msra.mxu0 0.0
    %125 = vmatprep.subr.mxu0 0.0
    %126 = vmatpush1.msra.mxu0 0.0
    %127 = vmatprep.subr.mxu0 0.0
    %128 = vmatpush1.msra.mxu0 0.0
    %129 = vmatprep.subr.mxu0 0.0
    %130 = vmatpush1.msra.mxu0 0.0
    %131 = vmatprep.subr.mxu0 0.0
    %132 = vmatpush1.msra.mxu0 0.0
    %133 = vmatprep.subr.mxu0 0.0
    %134 = vmatpush1.msra.mxu0 0.0
    %135 = vmatprep.subr.mxu0 0.0
    %136 = vmatpush1.msra.mxu0 0.0
    %137 = vmatprep.subr.mxu0 0.0
    %138 = vmatpush1.msra.mxu0 0.0
    %139 = vmatprep.subr.mxu0 0.0
    %140 = vmatpush1.msra.mxu0 0.0
    %141 = vmatprep.subr.mxu0 0.0
    %142 = vmatpush1.msra.mxu0 0.0
    %143 = vmatprep.subr.mxu0 0.0
    %144 = vmatpush1.msra.mxu0 0.0
    %145 = vmatprep.subr.mxu0 0.0
    %146 = vmatpush1.msra.mxu0 0.0
    %147 = vmatprep.subr.mxu0 0.0
    %148 = vmatpush1.msra.mxu0 0.0
    %149 = vmatprep.subr.mxu0 0.0
    %150 = vmatpush1.msra.mxu0 0.0
    %151 = vmatprep.subr.mxu0 0.0
    %152 = vmatpush1.msra.mxu0 0.0
    %153 = vmatprep.subr.mxu0 0.0
    %154 = vmatpush1.msra.mxu0 0.0
    %155 = vmatprep.subr.mxu0 0.0
    %156 = vmatpush1.msra.mxu0 0.0
    %157 = vmatprep.subr.mxu0 0.0
    %158 = vmatpush1.msra.mxu0 0.0
    %159 = vmatprep.subr.mxu0 0.0
    %160 = vmatpush1.msra.mxu0 0.0
    %161 = vmatprep.subr.mxu0 0.0
    %162 = vmatpush1.msra.mxu0 0.0
    %163 = vmatprep.subr.mxu0 0.0
    %164 = vmatpush1.msra.mxu0 0.0
    %165 = vmatprep.subr.mxu0 0.0
    %166 = vmatpush1.msra.mxu0 0.0
    %167 = vmatprep.subr.mxu0 0.0
    %168 = vmatpush1.msra.mxu0 0.0
    %169 = vmatprep.subr.mxu0 0.0
    %170 = vmatpush1.msra.mxu0 0.0
    %171 = vmatprep.subr.mxu0 0.0
    %172 = vmatpush1.msra.mxu0 0.0
    %173 = vmatprep.subr.mxu0 0.0
    %174 = vmatpush1.msra.mxu0 0.0
    %175 = vmatprep.subr.mxu0 0.0
    %176 = vmatpush1.msra.mxu0 0.0
    %177 = vmatprep.subr.mxu0 0.0
    %178 = vmatpush1.msra.mxu0 0.0
    %179 = vmatprep.subr.mxu0 0.0
    %180 = vmatpush1.msra.mxu0 0.0
    %181 = vmatprep.subr.mxu0 0.0
    %182 = vmatpush1.msra.mxu0 0.0
    %183 = vmatprep.mubr.f32.mxu0 0.0
    %184 = vmatmul.mubr.f32.gmra.mrb[0].mxu0 %v92
    %v185 = vpop.f32.mrb[0].mxu0
    %v186 = vadd.f32 %v53, %v185
    %v187 = vpop.f32.mrb[0].mxu0
    %188 = vmatprep.mubr.f32.mxu0 0.0
    %189 = vmatmul.mubr.f32.gmra.mrb[0].mxu0 %v95
    %v190 = vpop.f32.mrb[0].mxu0
    %v191 = vadd.f32 %v58, %v190
    %v192 = vpop.f32.mrb[0].mxu0
    %193 = vmatprep.mubr.f32.mxu0 0.0
    %194 = vmatmul.mubr.f32.gmra.mrb[0].mxu0 %v98
    %v195 = vpop.f32.mrb[0].mxu0
    %v196 = vadd.f32 %v63, %v195
    %v197 = vpop.f32.mrb[0].mxu0
    %198 = vmatprep.mubr.f32.mxu0 0.0
    %199 = vmatmul.mubr.f32.gmra.mrb[0].mxu0 %v101
    %v200 = vpop.f32.mrb[0].mxu0
    %v201 = vadd.f32 %v68, %v200
    %v202 = vpop.f32.mrb[0].mxu0
    %203 = vmatprep.mubr.f32.mxu0 0.0
    %204 = vmatmul.mubr.f32.gmra.mrb[0].mxu0 %v104
    %v205 = vpop.f32.mrb[0].mxu0
    %v206 = vadd.f32 %v73, %v205
    %v207 = vpop.f32.mrb[0].mxu0
    %208 = vmatprep.mubr.f32.mxu0 0.0
    %209 = vmatmul.mubr.f32.gmra.mrb[0].mxu0 %v107
    %v210 = vpop.f32.mrb[0].mxu0
    %v211 = vadd.f32 %v78, %v210
    %v212 = vpop.f32.mrb[0].mxu0
    %213 = vmatprep.mubr.f32.mxu0 0.0
    %214 = vmatmul.mubr.f32.gmra.mrb[0].mxu0 %v110
    %v215 = vpop.f32.mrb[0].mxu0
    %v216 = vadd.f32 %v83, %v215
    %v217 = vpop.f32.mrb[0].mxu0
    %218 = vmatprep.mubr.f32.mxu0 0.0
    %219 = vmatmul.mubr.f32.gmra.mrb[0].mxu0 %v113
    %v220 = vpop.f32.mrb[0].mxu0
    %v221 = vadd.f32 %v88, %v220
    %v222 = vpop.f32.mrb[0].mxu0
    %223 = vdwg.mxu0
    %v224 = vmax.f32 %v186, 0.0
    %v225 = vmax.f32 %v191, 0.0
    %v226 = vmax.f32 %v196, 0.0
    %v227 = vmax.f32 %v201, 0.0
    %v228 = vmax.f32 %v206, 0.0
    %v229 = vmax.f32 %v211, 0.0
    %v230 = vmax.f32 %v216, 0.0
    %v231 = vmax.f32 %v221, 0.0
    %v232 = vld [vmem:[%s3] sm:$0xff]
    %v233 = vld [vmem:[%s3 + $0x8] sm:$0xff]
    %v234 = vld [vmem:[%s3 + $0x10] sm:$0xff]
    %v235 = vld [vmem:[%s3 + $0x18] sm:$0xff]
    %v236 = vld [vmem:[%s4] sm:$0xff]
    %v237 = vld [vmem:[%s4 + $0x8] sm:$0xff]
    %v238 = vld [vmem:[%s4 + $0x10] sm:$0xff]
    %v239 = vld [vmem:[%s4 + $0x18] sm:$0xff]
    %241 = vset.pattern.permute.xlu0 0
    %242 = vperm.xlu0 %241, %v236
    %v243 = vpop.permute.xlu0 %242
    %246 = vset.pattern.permute.xlu0 0
    %247 = vperm.xlu0 %246, %v237
    %v248 = vpop.permute.xlu0 %247
    %251 = vset.pattern.permute.xlu0 0
    %252 = vperm.xlu0 %251, %v238
    %v253 = vpop.permute.xlu0 %252
    %256 = vset.pattern.permute.xlu0 0
    %257 = vperm.xlu0 %256, %v239
    %v258 = vpop.permute.xlu0 %257
    %vm260 = vcmask 523264
    %v262 = vsel %vm260, %v232, 0
    %v265 = vsel %vm260, %v233, 0
    %v268 = vsel %vm260, %v234, 0
    %v271 = vsel %vm260, %v235, 0
    %273 = vmatprep.subr.mxu0 0.0
    %274 = vmatpush1.msra.mxu0 %v224
    %275 = vmatprep.subr.mxu0 0.0
    %276 = vmatpush1.msra.mxu0 %v225
    %277 = vmatprep.subr.mxu0 0.0
    %278 = vmatpush1.msra.mxu0 %v226
    %279 = vmatprep.subr.mxu0 0.0
    %280 = vmatpush1.msra.mxu0 %v227
    %281 = vmatprep.subr.mxu0 0.0
    %282 = vmatpush1.msra.mxu0 %v228
    %283 = vmatprep.subr.mxu0 0.0
    %284 = vmatpush1.msra.mxu0 %v229
    %285 = vmatprep.subr.mxu0 0.0
    %286 = vmatpush1.msra.mxu0 %v230
    %287 = vmatprep.subr.mxu0 0.0
    %288 = vmatpush1.msra.mxu0 %v231
    %289 = vmatprep.subr.mxu0 0.0
    %290 = vmatpush1.msra.mxu0 0.0
    %291 = vmatprep.subr.mxu0 0.0
    %292 = vmatpush1.msra.mxu0 0.0
    %293 = vmatprep.subr.mxu0 0.0
    %294 = vmatpush1.msra.mxu0 0.0
    %295 = vmatprep.subr.mxu0 0.0
    %296 = vmatpush1.msra.mxu0 0.0
    %297 = vmatprep.subr.mxu0 0.0
    %298 = vmatpush1.msra.mxu0 0.0
    %299 = vmatprep.subr.mxu0 0.0
    %300 = vmatpush1.msra.mxu0 0.0
    %301 = vmatprep.subr.mxu0 0.0
    %302 = vmatpush1.msra.mxu0 0.0
    %303 = vmatprep.subr.mxu0 0.0
    %304 = vmatpush1.msra.mxu0 0.0
    %305 = vmatprep.subr.mxu0 0.0
    %306 = vmatpush1.msra.mxu0 0.0
    %307 = vmatprep.subr.mxu0 0.0
    %308 = vmatpush1.msra.mxu0 0.0
    %309 = vmatprep.subr.mxu0 0.0
    %310 = vmatpush1.msra.mxu0 0.0
    %311 = vmatprep.subr.mxu0 0.0
    %312 = vmatpush1.msra.mxu0 0.0
    %313 = vmatprep.subr.mxu0 0.0
    %314 = vmatpush1.msra.mxu0 0.0
    %315 = vmatprep.subr.mxu0 0.0
    %316 = vmatpush1.msra.mxu0 0.0
    %317 = vmatprep.subr.mxu0 0.0
    %318 = vmatpush1.msra.mxu0 0.0
    %319 = vmatprep.subr.mxu0 0.0
    %320 = vmatpush1.msra.mxu0 0.0
    %321 = vmatprep.subr.mxu0 0.0
    %322 = vmatpush1.msra.mxu0 0.0
    %323 = vmatprep.subr.mxu0 0.0
    %324 = vmatpush1.msra.mxu0 0.0
    %325 = vmatprep.subr.mxu0 0.0
    %326 = vmatpush1.msra.mxu0 0.0
    %327 = vmatprep.subr.mxu0 0.0
    %328 = vmatpush1.msra.mxu0 0.0
    %329 = vmatprep.subr.mxu0 0.0
    %330 = vmatpush1.msra.mxu0 0.0
    %331 = vmatprep.subr.mxu0 0.0
    %332 = vmatpush1.msra.mxu0 0.0
    %333 = vmatprep.subr.mxu0 0.0
    %334 = vmatpush1.msra.mxu0 0.0
    %335 = vmatprep.subr.mxu0 0.0
    %336 = vmatpush1.msra.mxu0 0.0
    %337 = vmatprep.mubr.f32.mxu0 0.0
    %338 = vmatmul.mubr.f32.gmra.mrb[0].mxu0 %v262
    %v339 = vpop.f32.mrb[0].mxu0
    %v340 = vadd.f32 %v243, %v339
    %v341 = vpop.f32.mrb[0].mxu0
    %342 = vmatprep.mubr.f32.mxu0 0.0
    %343 = vmatmul.mubr.f32.gmra.mrb[0].mxu0 %v265
    %v344 = vpop.f32.mrb[0].mxu0
    %v345 = vadd.f32 %v248, %v344
    %v346 = vpop.f32.mrb[0].mxu0
    %347 = vmatprep.mubr.f32.mxu0 0.0
    %348 = vmatmul.mubr.f32.gmra.mrb[0].mxu0 %v268
    %v349 = vpop.f32.mrb[0].mxu0
    %v350 = vadd.f32 %v253, %v349
    %v351 = vpop.f32.mrb[0].mxu0
    %352 = vmatprep.mubr.f32.mxu0 0.0
    %353 = vmatmul.mubr.f32.gmra.mrb[0].mxu0 %v271
    %v354 = vpop.f32.mrb[0].mxu0
    %v355 = vadd.f32 %v258, %v354
    %v356 = vpop.f32.mrb[0].mxu0
    %357 = vdwg.mxu0
    %v358 = vmax.f32 %v340, 0.0
    %v359 = vmax.f32 %v345, 0.0
    %v360 = vmax.f32 %v350, 0.0
    %v361 = vmax.f32 %v355, 0.0
    %v362 = vld [vmem:[%s5] sm:$0xff]
    %v363 = vld [vmem:[%s5 + $0x8] sm:$0xff]
    %v364 = vld [vmem:[%s6] sm:$0xff]
    %v365 = vld [vmem:[%s6 + $0x8] sm:$0xff]
    %367 = vset.pattern.permute.xlu0 0
    %368 = vperm.xlu0 %367, %v364
    %v369 = vpop.permute.xlu0 %368
    %372 = vset.pattern.permute.xlu0 0
    %373 = vperm.xlu0 %372, %v365
    %v374 = vpop.permute.xlu0 %373
    %vm376 = vcmask 261120
    %v378 = vsel %vm376, %v362, 0
    %v381 = vsel %vm376, %v363, 0
    %383 = vmatprep.subr.mxu0 0.0
    %384 = vmatpush1.msra.mxu0 %v358
    %385 = vmatprep.subr.mxu0 0.0
    %386 = vmatpush1.msra.mxu0 %v359
    %387 = vmatprep.subr.mxu0 0.0
    %388 = vmatpush1.msra.mxu0 %v360
    %389 = vmatprep.subr.mxu0 0.0
    %390 = vmatpush1.msra.mxu0 %v361
    %391 = vmatprep.subr.mxu0 0.0
    %392 = vmatpush1.msra.mxu0 0.0
    %393 = vmatprep.subr.mxu0 0.0
    %394 = vmatpush1.msra.mxu0 0.0
    %395 = vmatprep.subr.mxu0 0.0
    %396 = vmatpush1.msra.mxu0 0.0
    %397 = vmatprep.subr.mxu0 0.0
    %398 = vmatpush1.msra.mxu0 0.0
    %399 = vmatprep.subr.mxu0 0.0
    %400 = vmatpush1.msra.mxu0 0.0
    %401 = vmatprep.subr.mxu0 0.0
    %402 = vmatpush1.msra.mxu0 0.0
    %403 = vmatprep.subr.mxu0 0.0
    %404 = vmatpush1.msra.mxu0 0.0
    %405 = vmatprep.subr.mxu0 0.0
    %406 = vmatpush1.msra.mxu0 0.0
    %407 = vmatprep.subr.mxu0 0.0
    %408 = vmatpush1.msra.mxu0 0.0
    %409 = vmatprep.subr.mxu0 0.0
    %410 = vmatpush1.msra.mxu0 0.0
    %411 = vmatprep.subr.mxu0 0.0
    %412 = vmatpush1.msra.mxu0 0.0
    %413 = vmatprep.subr.mxu0 0.0
    %414 = vmatpush1.msra.mxu0 0.0
    %415 = vmatprep.subr.mxu0 0.0
    %416 = vmatpush1.msra.mxu0 0.0
    %417 = vmatprep.subr.mxu0 0.0
    %418 = vmatpush1.msra.mxu0 0.0
    %419 = vmatprep.subr.mxu0 0.0
    %420 = vmatpush1.msra.mxu0 0.0
    %421 = vmatprep.subr.mxu0 0.0
    %422 = vmatpush1.msra.mxu0 0.0
    %423 = vmatprep.subr.mxu0 0.0
    %424 = vmatpush1.msra.mxu0 0.0
    %425 = vmatprep.subr.mxu0 0.0
    %426 = vmatpush1.msra.mxu0 0.0
    %427 = vmatprep.subr.mxu0 0.0
    %428 = vmatpush1.msra.mxu0 0.0
    %429 = vmatprep.subr.mxu0 0.0
    %430 = vmatpush1.msra.mxu0 0.0
    %431 = vmatprep.subr.mxu0 0.0
    %432 = vmatpush1.msra.mxu0 0.0
    %433 = vmatprep.subr.mxu0 0.0
    %434 = vmatpush1.msra.mxu0 0.0
    %435 = vmatprep.subr.mxu0 0.0
    %436 = vmatpush1.msra.mxu0 0.0
    %437 = vmatprep.subr.mxu0 0.0
    %438 = vmatpush1.msra.mxu0 0.0
    %439 = vmatprep.subr.mxu0 0.0
    %440 = vmatpush1.msra.mxu0 0.0
    %441 = vmatprep.subr.mxu0 0.0
    %442 = vmatpush1.msra.mxu0 0.0
    %443 = vmatprep.subr.mxu0 0.0
    %444 = vmatpush1.msra.mxu0 0.0
    %445 = vmatprep.subr.mxu0 0.0
    %446 = vmatpush1.msra.mxu0 0.0
    %447 = vmatprep.mubr.f32.mxu0 0.0
    %448 = vmatmul.mubr.f32.gmra.mrb[0].mxu0 %v378
    %v449 = vpop.f32.mrb[0].mxu0
    %v450 = vadd.f32 %v369, %v449
    %v451 = vpop.f32.mrb[0].mxu0
    %452 = vmatprep.mubr.f32.mxu0 0.0
    %453 = vmatmul.mubr.f32.gmra.mrb[0].mxu0 %v381
    %v454 = vpop.f32.mrb[0].mxu0
    %v455 = vadd.f32 %v374, %v454
    %v456 = vpop.f32.mrb[0].mxu0
    %457 = vdwg.mxu0
    %v458 = vmax.f32 %v450, 0.0
    %v459 = vmax.f32 %v455, 0.0
    %v460 = vld [vmem:[%s7] sm:$0xf]
    %v461 = vld [vmem:[%s8] sm:$0xf]
    %463 = vset.pattern.permute.xlu0 0
    %464 = vperm.xlu0 %463, %v461
    %v465 = vpop.permute.xlu0 %464
    %vm467 = vcmask 130048
    %v469 = vsel %vm467, %v460, 0
    %471 = vmatprep.subr.mxu0 0.0
    %472 = vmatpush1.msra.mxu0 %v458
    %473 = vmatprep.subr.mxu0 0.0
    %474 = vmatpush1.msra.mxu0 %v459
    %475 = vmatprep.subr.mxu0 0.0
    %476 = vmatpush1.msra.mxu0 0.0
    %477 = vmatprep.subr.mxu0 0.0
    %478 = vmatpush1.msra.mxu0 0.0
    %479 = vmatprep.subr.mxu0 0.0
    %480 = vmatpush1.msra.mxu0 0.0
    %481 = vmatprep.subr.mxu0 0.0
    %482 = vmatpush1.msra.mxu0 0.0
    %483 = vmatprep.subr.mxu0 0.0
    %484 = vmatpush1.msra.mxu0 0.0
    %485 = vmatprep.subr.mxu0 0.0
    %486 = vmatpush1.msra.mxu0 0.0
    %487 = vmatprep.subr.mxu0 0.0
    %488 = vmatpush1.msra.mxu0 0.0
    %489 = vmatprep.subr.mxu0 0.0
    %490 = vmatpush1.msra.mxu0 0.0
    %491 = vmatprep.subr.mxu0 0.0
    %492 = vmatpush1.msra.mxu0 0.0
    %493 = vmatprep.subr.mxu0 0.0
    %494 = vmatpush1.msra.mxu0 0.0
    %495 = vmatprep.subr.mxu0 0.0
    %496 = vmatpush1.msra.mxu0 0.0
    %497 = vmatprep.subr.mxu0 0.0
    %498 = vmatpush1.msra.mxu0 0.0
    %499 = vmatprep.subr.mxu0 0.0
    %500 = vmatpush1.msra.mxu0 0.0
    %501 = vmatprep.subr.mxu0 0.0
    %502 = vmatpush1.msra.mxu0 0.0
    %503 = vmatprep.subr.mxu0 0.0
    %504 = vmatpush1.msra.mxu0 0.0
    %505 = vmatprep.subr.mxu0 0.0
    %506 = vmatpush1.msra.mxu0 0.0
    %507 = vmatprep.subr.mxu0 0.0
    %508 = vmatpush1.msra.mxu0 0.0
    %509 = vmatprep.subr.mxu0 0.0
    %510 = vmatpush1.msra.mxu0 0.0
    %511 = vmatprep.subr.mxu0 0.0
    %512 = vmatpush1.msra.mxu0 0.0
    %513 = vmatprep.subr.mxu0 0.0
    %514 = vmatpush1.msra.mxu0 0.0
    %515 = vmatprep.subr.mxu0 0.0
    %516 = vmatpush1.msra.mxu0 0.0
    %517 = vmatprep.subr.mxu0 0.0
    %518 = vmatpush1.msra.mxu0 0.0
    %519 = vmatprep.subr.mxu0 0.0
    %520 = vmatpush1.msra.mxu0 0.0
    %521 = vmatprep.subr.mxu0 0.0
    %522 = vmatpush1.msra.mxu0 0.0
    %523 = vmatprep.subr.mxu0 0.0
    %524 = vmatpush1.msra.mxu0 0.0
    %525 = vmatprep.subr.mxu0 0.0
    %526 = vmatpush1.msra.mxu0 0.0
    %527 = vmatprep.subr.mxu0 0.0
    %528 = vmatpush1.msra.mxu0 0.0
    %529 = vmatprep.subr.mxu0 0.0
    %530 = vmatpush1.msra.mxu0 0.0
    %531 = vmatprep.subr.mxu0 0.0
    %532 = vmatpush1.msra.mxu0 0.0
    %533 = vmatprep.subr.mxu0 0.0
    %534 = vmatpush1.msra.mxu0 0.0
    %535 = vmatprep.mubr.f32.mxu0 0.0
    %536 = vmatmul.mubr.f32.gmra.mrb[0].mxu0 %v469
    %v537 = vpop.f32.mrb[0].mxu0
    %v538 = vadd.f32 %v465, %v537
    %v539 = vpop.f32.mrb[0].mxu0
    %540 = vdwg.mxu0
    %541 = vst [vmem:[#allocation2] sm:$0xf] %v538
    // Predicated region
    $region38: #{tpu_custom_call.1} parent=1 // pred_check
      _
    $region39: #{tpu_custom_call.1} parent=1 // pred_check_branch
      %543 = sbr.rel (0) target = $region41
    $region40: #{tpu_custom_call.1} parent=1 // pred_region
      %s545 = ssub.s32 64, 64
      %546 = vsyncadd [#allocation3], %s545
      %s548 = sshll.u32 [#allocation2], 4
      %s549 = int_to_ptr.vmem [resolvable:$true] %s548
      %551 = dma.vmem_to_hbm [thread:$0]  %s549, 64, %s9, [#allocation3]
    $region41: #{tpu_custom_call.1} parent=1 // pred_fallthru
      _
    // Predicated region
    $region42: #{tpu_custom_call.1} parent=1 // pred_check
      _
    $region43: #{tpu_custom_call.1} parent=1 // pred_check_branch
      %553 = sbr.rel (0) target = $region45
    $region44: #{tpu_custom_call.1} parent=1 // pred_region
      %554 = dma.done [#allocation3], 64
    $region45: #{tpu_custom_call.1} parent=1 // pred_fallthru
      _
    %555 = vsyncpa [#allocation3], 1

</llo_original>
